<compile_context>
chip_gen: v6e
topology: v6e:2x2x1
jax: 0.10.0
libtpu: 0.0.40
codegen_flags: <defaults>
</compile_context>

<pallas_src>
import jax
import jax.numpy as jnp
from jax import lax
from jax.experimental import pallas as pl
from jax.experimental.pallas import tpu as pltpu

BN_EPS = 1e-5
_VMEM_LIMIT = 32 * 1024 * 1024     # explicit scoped-VMEM budget (v5e/v6e/v7x safe)
_TILE_BUDGET = 24 * 1024 * 1024    # leave headroom under the limit for the pipeline


def _pick_tile_m(m, bytes_per_m):
    """Largest lane-dense tile dividing M whose double-buffered streams fit VMEM."""
    for t in (2048, 1024, 512, 256, 128):
        if m % t == 0 and 2 * t * bytes_per_m <= _TILE_BUDGET:
            return t
    for t in (2048, 1024, 512, 256, 128):
        if m % t == 0:
            return t
    return m   # odd sizes: one full-extent block (still correct)


# --------------------------- Pallas kernels ----------------------------------

def _conv_stats_kernel(x_ref, w_ref, conv_ref, psum_ref, psq_ref):
    # x_ref:    (1, Kp, TILE_M)   phase im2col tile (K on sublanes, M on lanes)
    # w_ref:    (1, Cout, Kp)     phase filter
    # conv_ref: (1, Cout, TILE_M) conv output tile (lane-dense stores)
    # psum/psq: (1, 1, Cout, 1)   per-tile per-channel sum / sum-of-squares
    conv = jnp.dot(w_ref[0], x_ref[0], preferred_element_type=jnp.float32)
    conv_ref[0] = conv
    psum_ref[0, 0] = jnp.sum(conv, axis=1, keepdims=True)
    psq_ref[0, 0] = jnp.sum(conv * conv, axis=1, keepdims=True)


def _bn_relu_kernel(conv_ref, scale_ref, shift_ref, o_ref):
    # conv_ref: (1, Cout, TILE_M); scale/shift: (Cout, 1) broadcast over lanes.
    y = conv_ref[0] * scale_ref[...] + shift_ref[...]
    o_ref[0] = jnp.maximum(y, 0.0)


# ------------------------------ wrapper ---------------------------------------

def upconv_forward(x_nchw, conv_w, conv_b, bn_gamma, bn_beta,
                   *, matmul_dtype=jnp.float32):
    """x: (N, Cin, H, W), conv_w: (Cout, Cin, 3, 3). Returns (N, Cout, 2H, 2W)."""
    del conv_b  # exactly cancelled by the training-mode BatchNorm mean subtraction
    N, Cin, H, W = x_nchw.shape
    Cout = conv_w.shape[0]
    H2, W2 = 2 * H, 2 * W
    M = N * H * W          # rows per phase (original resolution)
    Kp = 4 * Cin           # 2x2 taps per phase

    # ---- glue: build the 4 subpixel phase filters (exact 0/1 tap foldings) ---
    # Output row parity di selects which 3x3 row-taps collapse onto the 2x2
    # row-tap r (same for columns): di=0 -> {0},{1,2}; di=1 -> {0,1},{2}.
    groups = (((0,), (1, 2)), ((0, 1), (2,)))
    w_f = conv_w.astype(jnp.float32)                       # (Cout, Cin, 3, 3)
    phase_w = []
    for di in range(2):
        for dj in range(2):
            taps = []
            for r in range(2):
                wr = sum(w_f[:, :, kh, :] for kh in groups[di][r])   # (Cout, Cin, 3)
                for c in range(2):
                    taps.append(sum(wr[:, :, kw] for kw in groups[dj][c]))  # (Cout, Cin)
            pw = jnp.transpose(jnp.stack(taps, axis=0), (1, 0, 2))   # (Cout, 4, Cin)
            phase_w.append(pw.reshape(Cout, Kp))                     # K order (r, c, cin)
    w_t = jnp.stack(phase_w, axis=0).astype(matmul_dtype)            # (4, Cout, Kp)

    # ---- glue: per-phase 2x2 im2col at the ORIGINAL resolution ----------------
    x_pad = jnp.pad(x_nchw.astype(jnp.float32), ((0, 0), (0, 0), (1, 1), (1, 1)))
    cols = []
    for di in range(2):
        for dj in range(2):
            taps = [x_pad[:, :, di + r:di + r + H, dj + c:dj + c + W]
                    for r in range(2) for c in range(2)]             # (N, Cin, H, W) each
            t = jnp.transpose(jnp.stack(taps, axis=0), (0, 2, 1, 3, 4))
            cols.append(t.reshape(Kp, M))                            # K=(r,c,cin), M=(n,h,w)
    x_col = jnp.stack(cols, axis=0).astype(matmul_dtype)             # (4, Kp, M)

    m_itemsize = jnp.dtype(matmul_dtype).itemsize
    tile_m = _pick_tile_m(M, Kp * m_itemsize + 4 * Cout * 4)
    n_tiles = M // tile_m
    grid = (4, n_tiles)

    # ---- pass 1: conv matmul + per-channel sum / sum-of-squares partials ------
    cost1 = pl.CostEstimate(
        flops=int(2 * 4 * Cout * Kp * M),
        transcendentals=0,
        bytes_accessed=int(4 * Kp * M * m_itemsize + 4 * (4 * Cout * Kp + 4 * Cout * M)))
    conv, psum, psq = pl.pallas_call(
        _conv_stats_kernel,
        out_shape=(jax.ShapeDtypeStruct((4, Cout, M), jnp.float32),
                   jax.ShapeDtypeStruct((4, n_tiles, Cout, 1), jnp.float32),
                   jax.ShapeDtypeStruct((4, n_tiles, Cout, 1), jnp.float32)),
        grid=grid,
        in_specs=[
            pl.BlockSpec((1, Kp, tile_m), lambda p, i: (p, 0, i)),
            pl.BlockSpec((1, Cout, Kp), lambda p, i: (p, 0, 0)),
        ],
        out_specs=(
            pl.BlockSpec((1, Cout, tile_m), lambda p, i: (p, 0, i)),
            pl.BlockSpec((1, 1, Cout, 1), lambda p, i: (p, i, 0, 0)),
            pl.BlockSpec((1, 1, Cout, 1), lambda p, i: (p, i, 0, 0)),
        ),
        compiler_params=pltpu.CompilerParams(
            dimension_semantics=("parallel", "parallel"),
            vmem_limit_bytes=_VMEM_LIMIT),
        cost_estimate=cost1,
    )(x_col, w_t)

    # ---- tiny O(Cout) BatchNorm finalize in plain JAX -------------------------
    # TODO(synk): PyTorch BatchNorm2d also updates running_mean/running_var
    # buffers in training; that side effect has no place in this forward output.
    count = jnp.float32(N * H2 * W2)                   # == 4 * M
    mean = jnp.sum(psum, axis=(0, 1)) / count          # (Cout, 1)
    var = jnp.maximum(jnp.sum(psq, axis=(0, 1)) / count - mean * mean, 0.0)
    inv_std = lax.rsqrt(var + BN_EPS)
    scale = bn_gamma.astype(jnp.float32).reshape(Cout, 1) * inv_std
    shift = bn_beta.astype(jnp.float32).reshape(Cout, 1) - mean * scale

    # ---- pass 2: y = max(conv * scale + shift, 0), streamed lane-dense --------
    cost2 = pl.CostEstimate(
        flops=int(3 * 4 * Cout * M),
        transcendentals=0,
        bytes_accessed=int(4 * (2 * 4 * Cout * M + 2 * Cout)))
    y = pl.pallas_call(
        _bn_relu_kernel,
        out_shape=jax.ShapeDtypeStruct((4, Cout, M), jnp.float32),
        grid=grid,
        in_specs=[
            pl.BlockSpec((1, Cout, tile_m), lambda p, i: (p, 0, i)),
            pl.BlockSpec((Cout, 1), lambda p, i: (0, 0)),
            pl.BlockSpec((Cout, 1), lambda p, i: (0, 0)),
        ],
        out_specs=pl.BlockSpec((1, Cout, tile_m), lambda p, i: (p, 0, i)),
        # Overwrite the conv intermediate in place (same shape/dtype/tiling):
        # no extra HBM footprint for the normalized result.
        input_output_aliases={0: 0},
        compiler_params=pltpu.CompilerParams(
            dimension_semantics=("parallel", "parallel"),
            vmem_limit_bytes=_VMEM_LIMIT),
        cost_estimate=cost2,
    )(conv, scale, shift)

    # ---- glue: pixel-shuffle the 4 phases back to NCHW -------------------------
    # y[di, dj, c, n, h, w] -> out[n, c, 2h+di, 2w+dj]
    y = y.reshape(2, 2, Cout, N, H, W)
    return jnp.transpose(y, (3, 2, 4, 0, 5, 1)).reshape(N, Cout, H2, W2)


# ------------------------- pure-JAX reference ---------------------------------

def _reference_forward(x_nchw, conv_w, conv_b, bn_gamma, bn_beta):
    x_up = jnp.repeat(jnp.repeat(x_nchw, 2, axis=2), 2, axis=3)
    conv = lax.conv_general_dilated(
        x_up, conv_w, window_strides=(1, 1), padding=((1, 1), (1, 1)),
        dimension_numbers=("NCHW", "OIHW", "NCHW"),
        precision=lax.Precision.HIGHEST)
    conv = conv + conv_b.reshape(1, -1, 1, 1)
    mean = jnp.mean(conv, axis=(0, 2, 3), keepdims=True)
    var = jnp.mean((conv - mean) ** 2, axis=(0, 2, 3), keepdims=True)
    y = (conv - mean) * lax.rsqrt(var + BN_EPS)
    y = y * bn_gamma.reshape(1, -1, 1, 1) + bn_beta.reshape(1, -1, 1, 1)
    return jnp.maximum(y, 0.0)


if __name__ == "__main__":
    key = jax.random.PRNGKey(0)
    k_x, k_w, k_b = jax.random.split(key, 3)

    N, Cin, H, W = 2, 4, 16, 16
    Cout = 8

    x = jax.random.normal(k_x, (N, Cin, H, W), dtype=jnp.float32)
    conv_w = jax.random.normal(k_w, (Cout, Cin, 3, 3), dtype=jnp.float32) * 0.1
    conv_b = jax.random.normal(k_b, (Cout,), dtype=jnp.float32) * 0.1
    bn_gamma = jnp.ones((Cout,), dtype=jnp.float32)   # PyTorch BatchNorm2d default
    bn_beta = jnp.zeros((Cout,), dtype=jnp.float32)   # PyTorch BatchNorm2d default

    fwd = jax.jit(upconv_forward)
    out = jax.block_until_ready(fwd(x, conv_w, conv_b, bn_gamma, bn_beta))
    ref = jax.block_until_ready(
        _reference_forward(x, conv_w, conv_b, bn_gamma, bn_beta))

    assert out.shape == (N, Cout, 2 * H, 2 * W)
    assert jnp.allclose(out, ref, atol=1e-3, rtol=1e-3)

    print("KERNEL_OK")
</pallas_src>

<mosaic_0001>
module attributes {stable_mosaic.version = 11 : i64} {
  func.func @_bn_relu_kernel(%arg0: i32, %arg1: i32, %arg2: memref<1x8x512xf32, #tpu.memory_space<vmem>>, %arg3: memref<8x1xf32, #tpu.memory_space<vmem>>, %arg4: memref<8x1xf32, #tpu.memory_space<vmem>>, %arg5: memref<1x8x512xf32, #tpu.memory_space<vmem>>) attributes {dimension_semantics = [#tpu.dimension_semantics<parallel>, #tpu.dimension_semantics<parallel>], iteration_bounds = array<i64: 4, 1>, scalar_prefetch = 0 : i64, scratch_operands = 0 : i64, tpu.core_type = #tpu.core_type<tc>, window_params = [{transform_indices = @transform_0, window_bounds = array<i64: 1, 8, 512>}, {pipeline_mode = #tpu.pipeline_mode<synchronous>, transform_indices = @transform_1, window_bounds = array<i64: 8, 1>}, {pipeline_mode = #tpu.pipeline_mode<synchronous>, transform_indices = @transform_2, window_bounds = array<i64: 8, 1>}, {transform_indices = @transform_3, window_bounds = array<i64: 1, 8, 512>}]} {
    %c0 = arith.constant 0 : index
    %c0_0 = arith.constant 0 : index
    %c0_1 = arith.constant 0 : index
    %0 = vector.load %arg2[%c0, %c0_0, %c0_1] : memref<1x8x512xf32, #tpu.memory_space<vmem>>, vector<1x8x512xf32>
    %1 = vector.shape_cast %0 : vector<1x8x512xf32> to vector<8x512xf32>
    %c0_2 = arith.constant 0 : index
    %c0_3 = arith.constant 0 : index
    %2 = vector.load %arg3[%c0_2, %c0_3] : memref<8x1xf32, #tpu.memory_space<vmem>>, vector<8x1xf32>
    %3 = vector.broadcast %2 : vector<8x1xf32> to vector<8x512xf32>
    %4 = arith.mulf %1, %3 : vector<8x512xf32>
    %c0_4 = arith.constant 0 : index
    %c0_5 = arith.constant 0 : index
    %5 = vector.load %arg4[%c0_4, %c0_5] : memref<8x1xf32, #tpu.memory_space<vmem>>, vector<8x1xf32>
    %6 = vector.broadcast %5 : vector<8x1xf32> to vector<8x512xf32>
    %7 = arith.addf %4, %6 : vector<8x512xf32>
    %cst = arith.constant 0.000000e+00 : f32
    %8 = vector.broadcast %cst : f32 to vector<8x512xf32>
    %9 = arith.maximumf %7, %8 : vector<8x512xf32>
    %c0_6 = arith.constant 0 : index
    %c0_7 = arith.constant 0 : index
    %c0_8 = arith.constant 0 : index
    %10 = vector.load %arg5[%c0_6, %c0_7, %c0_8] : memref<1x8x512xf32, #tpu.memory_space<vmem>>, vector<1x8x512xf32>
    %11 = vector.shape_cast %10 : vector<1x8x512xf32> to vector<8x512xf32>
    %12 = vector.shape_cast %9 : vector<8x512xf32> to vector<1x8x512xf32>
    tpu.vector_store %arg5[%c0_6, %c0_7, %c0_8], %12 {strides = array<i32>} : memref<1x8x512xf32, #tpu.memory_space<vmem>>, vector<1x8x512xf32>,
    return
  }
  func.func @transform_0(%arg0: i32, %arg1: i32) -> (i32, i32, i32) {
    %c0_i32 = arith.constant 0 : i32
    %c0_i32_0 = arith.constant 0 : i32
    return %arg0, %c0_i32, %arg1 : i32, i32, i32
  }
  func.func @transform_1(%arg0: i32, %arg1: i32) -> (i32, i32) {
    %c0_i32 = arith.constant 0 : i32
    %c0_i32_0 = arith.constant 0 : i32
    %c0_i32_1 = arith.constant 0 : i32
    return %c0_i32, %c0_i32_0 : i32, i32
  }
  func.func @transform_2(%arg0: i32, %arg1: i32) -> (i32, i32) {
    %c0_i32 = arith.constant 0 : i32
    %c0_i32_0 = arith.constant 0 : i32
    %c0_i32_1 = arith.constant 0 : i32
    return %c0_i32, %c0_i32_0 : i32, i32
  }
  func.func @transform_3(%arg0: i32, %arg1: i32) -> (i32, i32, i32) {
    %c0_i32 = arith.constant 0 : i32
    %c0_i32_0 = arith.constant 0 : i32
    return %arg0, %c0_i32, %arg1 : i32, i32, i32
  }
}

module attributes {stable_mosaic.version = 11 : i64} {
  func.func @_conv_stats_kernel(%arg0: i32, %arg1: i32, %arg2: memref<1x16x512xf32, #tpu.memory_space<vmem>>, %arg3: memref<1x8x16xf32, #tpu.memory_space<vmem>>, %arg4: memref<1x8x512xf32, #tpu.memory_space<vmem>>, %arg5: memref<1x1x8x1xf32, #tpu.memory_space<vmem>>, %arg6: memref<1x1x8x1xf32, #tpu.memory_space<vmem>>) attributes {dimension_semantics = [#tpu.dimension_semantics<parallel>, #tpu.dimension_semantics<parallel>], iteration_bounds = array<i64: 4, 1>, scalar_prefetch = 0 : i64, scratch_operands = 0 : i64, tpu.core_type = #tpu.core_type<tc>, window_params = [{transform_indices = @transform_0, window_bounds = array<i64: 1, 16, 512>}, {transform_indices = @transform_1, window_bounds = array<i64: 1, 8, 16>}, {transform_indices = @transform_2, window_bounds = array<i64: 1, 8, 512>}, {transform_indices = @transform_3, window_bounds = array<i64: 1, 1, 8, 1>}, {transform_indices = @transform_4, window_bounds = array<i64: 1, 1, 8, 1>}]} {
    %c0 = arith.constant 0 : index
    %c0_0 = arith.constant 0 : index
    %c0_1 = arith.constant 0 : index
    %0 = vector.load %arg3[%c0, %c0_0, %c0_1] : memref<1x8x16xf32, #tpu.memory_space<vmem>>, vector<1x8x16xf32>
    %1 = vector.shape_cast %0 : vector<1x8x16xf32> to vector<8x16xf32>
    %c0_2 = arith.constant 0 : index
    %c0_3 = arith.constant 0 : index
    %c0_4 = arith.constant 0 : index
    %2 = vector.load %arg2[%c0_2, %c0_3, %c0_4] : memref<1x16x512xf32, #tpu.memory_space<vmem>>, vector<1x16x512xf32>
    %3 = vector.shape_cast %2 : vector<1x16x512xf32> to vector<16x512xf32>
    %cst = arith.constant dense<0.000000e+00> : vector<8x512xf32>
    %4 = tpu.matmul %1, %3, %cst {dimension_numbers = #tpu.dot_dimension_numbers<[1], [0], [0], [1], [0, 0, 1, 1], [], []>} : vector<8x16xf32>, vector<16x512xf32>, vector<8x512xf32> -> vector<8x512xf32>
    %c0_5 = arith.constant 0 : index
    %c0_6 = arith.constant 0 : index
    %c0_7 = arith.constant 0 : index
    %5 = vector.load %arg4[%c0_5, %c0_6, %c0_7] : memref<1x8x512xf32, #tpu.memory_space<vmem>>, vector<1x8x512xf32>
    %6 = vector.shape_cast %5 : vector<1x8x512xf32> to vector<8x512xf32>
    %7 = vector.shape_cast %4 : vector<8x512xf32> to vector<1x8x512xf32>
    tpu.vector_store %arg4[%c0_5, %c0_6, %c0_7], %7 {strides = array<i32>} : memref<1x8x512xf32, #tpu.memory_space<vmem>>, vector<1x8x512xf32>,
    %cst_8 = arith.constant dense<0.000000e+00> : vector<8xf32>
    %8 = vector.multi_reduction <add>, %4, %cst_8 [1] : vector<8x512xf32> to vector<8xf32>
    %9 = vector.shape_cast %8 : vector<8xf32> to vector<8x1xf32>
    %c0_9 = arith.constant 0 : index
    %c0_10 = arith.constant 0 : index
    %c0_11 = arith.constant 0 : index
    %c0_12 = arith.constant 0 : index
    %10 = vector.load %arg5[%c0_9, %c0_10, %c0_11, %c0_12] : memref<1x1x8x1xf32, #tpu.memory_space<vmem>>, vector<1x1x8x1xf32>
    %11 = vector.shape_cast %10 : vector<1x1x8x1xf32> to vector<8x1xf32>
    %12 = vector.shape_cast %9 : vector<8x1xf32> to vector<1x1x8x1xf32>
    tpu.vector_store %arg5[%c0_9, %c0_10, %c0_11, %c0_12], %12 {strides = array<i32>} : memref<1x1x8x1xf32, #tpu.memory_space<vmem>>, vector<1x1x8x1xf32>,
    %13 = arith.mulf %4, %4 : vector<8x512xf32>
    %cst_13 = arith.constant dense<0.000000e+00> : vector<8xf32>
    %14 = vector.multi_reduction <add>, %13, %cst_13 [1] : vector<8x512xf32> to vector<8xf32>
    %15 = vector.shape_cast %14 : vector<8xf32> to vector<8x1xf32>
    %c0_14 = arith.constant 0 : index
    %c0_15 = arith.constant 0 : index
    %c0_16 = arith.constant 0 : index
    %c0_17 = arith.constant 0 : index
    %16 = vector.load %arg6[%c0_14, %c0_15, %c0_16, %c0_17] : memref<1x1x8x1xf32, #tpu.memory_space<vmem>>, vector<1x1x8x1xf32>
    %17 = vector.shape_cast %16 : vector<1x1x8x1xf32> to vector<8x1xf32>
    %18 = vector.shape_cast %15 : vector<8x1xf32> to vector<1x1x8x1xf32>
    tpu.vector_store %arg6[%c0_14, %c0_15, %c0_16, %c0_17], %18 {strides = array<i32>} : memref<1x1x8x1xf32, #tpu.memory_space<vmem>>, vector<1x1x8x1xf32>,
    return
  }
  func.func @transform_0(%arg0: i32, %arg1: i32) -> (i32, i32, i32) {
    %c0_i32 = arith.constant 0 : i32
    %c0_i32_0 = arith.constant 0 : i32
    return %arg0, %c0_i32, %arg1 : i32, i32, i32
  }
  func.func @transform_1(%arg0: i32, %arg1: i32) -> (i32, i32, i32) {
    %c0_i32 = arith.constant 0 : i32
    %c0_i32_0 = arith.constant 0 : i32
    %c0_i32_1 = arith.constant 0 : i32
    return %arg0, %c0_i32, %c0_i32_0 : i32, i32, i32
  }
  func.func @transform_2(%arg0: i32, %arg1: i32) -> (i32, i32, i32) {
    %c0_i32 = arith.constant 0 : i32
    %c0_i32_0 = arith.constant 0 : i32
    return %arg0, %c0_i32, %arg1 : i32, i32, i32
  }
  func.func @transform_3(%arg0: i32, %arg1: i32) -> (i32, i32, i32, i32) {
    %c0_i32 = arith.constant 0 : i32
    %c0_i32_0 = arith.constant 0 : i32
    %c0_i32_1 = arith.constant 0 : i32
    return %arg0, %arg1, %c0_i32, %c0_i32_0 : i32, i32, i32, i32
  }
  func.func @transform_4(%arg0: i32, %arg1: i32) -> (i32, i32, i32, i32) {
    %c0_i32 = arith.constant 0 : i32
    %c0_i32_0 = arith.constant 0 : i32
    %c0_i32_1 = arith.constant 0 : i32
    return %arg0, %arg1, %c0_i32, %c0_i32_0 : i32, i32, i32, i32
  }
}

</mosaic_0001>

<llo_original>
// kernel: upconv_forward.3
$region0: #{upconv_forward.3}
  #allocation0 [shape = 'u32[]', space=smem, size = 0x4, offset = 0x4, fixed_abs, tag = 'smem constant byte address 0x4 - core index']
  #allocation1 [shape = 'u32[144,128]{1,0:T(1,128)}', space=vmem, size = 0x12000, scoped, tag = 'internal scratch']
  %s0 = inlined_call_operand.vmem [shape: f32[4,8,512], index: 0, kind: input, shape index: {}, may-alias: {0,3}]
  %s1 = inlined_call_operand.vmem [shape: f32[8,1], index: 1, kind: input, shape index: {}]
  %s2 = inlined_call_operand.vmem [shape: f32[8,1], index: 2, kind: input, shape index: {}]
  %s3 = inlined_call_operand.vmem [shape: f32[4,8,512], index: 3, kind: output, shape index: {}, may-alias: {0,3}]
  %s4 = sld [smem:[#allocation0]]
  $region45: #{upconv_forward.3} parent=0
    _
  %s6 = ssub.s32 1, %s4
  %s7 = scalar_select 0, %s6, %s4
  loop: start=0, step=1, limit=6
  $region2: #{upconv_forward.3} parent=0 // loop_pre_header
    _
  $region3: #{upconv_forward.3} parent=0 // loop_header
    %s9 = sphi 0, %s13
    %p10 = scmp.ge.s32.totalorder %s9, 6
    %s16 = sphi 0, %s28
    %s17 = sphi 0, %s24
    %s18 = sphi 0, %s16
    %s19 = sphi 0, %s17
    %s20 = sphi 0, %s18
    %s21 = sphi 0, %s19
    %s33 = sphi 0, %s35
    %s36 = sphi 0, %s33
    %s37 = sphi 0, %s36
    %s53 = sphi 0, %s37
    %s57 = sphi 0, %s57
    %s59 = sphi 0, %s57
    %s60 = sphi 0, %s59
    %s74 = sphi 0, %s60
    %s78 = sphi 0, %s78
    %s80 = sphi 0, %s78
    %s81 = sphi 0, %s80
    %s95 = sphi 0, %s81
    %s103 = sphi 0, %s105
    %s106 = sphi 0, %s103
    %s107 = sphi 0, %s106
    %s123 = sphi 0, %s107
  $region4: #{upconv_forward.3} parent=0 // loop_header_branch
    %12 = sbr.rel (%p10) target = $region8
  $region5: #{upconv_forward.3} parent=0 // loop_body
    %s14 = ssub.s32 %s9, 1
    %s15 = ssub.s32 %s9, 2
    %s22 = sadd.s32 1, %s17
    %p23 = scmp.ge.s32.totalorder %s22, 1
    %s24 = scalar_select %p23, 0, %s22
    %s25 = sadd.s32 1, %s16
    %s26 = scalar_select %p23, %s25, %s16
    %p27 = scmp.ge.s32.totalorder %s26, 4
    %s28 = scalar_select %p27, 0, %s26
    %s29 = ssub.s32 %s16, %s28
    %s30 = ssub.s32 %s17, %s24
    %s31 = sor.u32 %s29, %s30
    %p32 = scmp.eq.s32.totalorder %s31, 0
    %s34 = sadd.s32 %s33, 1
    %s35 = scalar_select %p32, %s33, %s34
    %p38 = pneg %p32
    %p39 = scmp.eq.s32.totalorder %s9, 3
    %p40 = por %p38, %p39
    %p41 = scmp.ne.s32.totalorder %s33, %s36
    %p42 = scmp.eq.s32.totalorder %s9, 0
    %p43 = por %p41, %p42
    %p44 = scmp.ne.s32.totalorder %s33, %s36
    %p45 = scmp.eq.s32.totalorder %s14, 3
    %p46 = por %p44, %p45
    %p47 = scmp.ne.s32.totalorder %s36, %s37
    %p48 = scmp.eq.s32.totalorder %s14, 0
    %p49 = por %p47, %p48
    %p50 = scmp.ne.s32.totalorder %s36, %s37
    %p51 = scmp.eq.s32.totalorder %s15, 3
    %p52 = por %p50, %p51
    %p54 = scmp.ne.s32.totalorder %s37, %s53
    %p55 = scmp.eq.s32.totalorder %s15, 0
    %p56 = por %p54, %p55
    %s58 = sadd.s32 %s57, 1
    %p61 = scmp.eq.s32.totalorder %s9, 3
    %p62 = scmp.ne.s32.totalorder %s57, %s59
    %p63 = scmp.eq.s32.totalorder %s9, 0
    %p64 = por %p62, %p63
    %p65 = scmp.ne.s32.totalorder %s57, %s59
    %p66 = scmp.eq.s32.totalorder %s14, 3
    %p67 = por %p65, %p66
    %p68 = scmp.ne.s32.totalorder %s59, %s60
    %p69 = scmp.eq.s32.totalorder %s14, 0
    %p70 = por %p68, %p69
    %p71 = scmp.ne.s32.totalorder %s59, %s60
    %p72 = scmp.eq.s32.totalorder %s15, 3
    %p73 = por %p71, %p72
    %p75 = scmp.ne.s32.totalorder %s60, %s74
    %p76 = scmp.eq.s32.totalorder %s15, 0
    %p77 = por %p75, %p76
    %s79 = sadd.s32 %s78, 1
    %p82 = scmp.eq.s32.totalorder %s9, 3
    %p83 = scmp.ne.s32.totalorder %s78, %s80
    %p84 = scmp.eq.s32.totalorder %s9, 0
    %p85 = por %p83, %p84
    %p86 = scmp.ne.s32.totalorder %s78, %s80
    %p87 = scmp.eq.s32.totalorder %s14, 3
    %p88 = por %p86, %p87
    %p89 = scmp.ne.s32.totalorder %s80, %s81
    %p90 = scmp.eq.s32.totalorder %s14, 0
    %p91 = por %p89, %p90
    %p92 = scmp.ne.s32.totalorder %s80, %s81
    %p93 = scmp.eq.s32.totalorder %s15, 3
    %p94 = por %p92, %p93
    %p96 = scmp.ne.s32.totalorder %s81, %s95
    %p97 = scmp.eq.s32.totalorder %s15, 0
    %p98 = por %p96, %p97
    %s99 = ssub.s32 %s16, %s28
    %s100 = ssub.s32 %s17, %s24
    %s101 = sor.u32 %s99, %s100
    %p102 = scmp.eq.s32.totalorder %s101, 0
    %s104 = sadd.s32 %s103, 1
    %s105 = scalar_select %p102, %s103, %s104
    %p108 = pneg %p102
    %p109 = scmp.eq.s32.totalorder %s9, 3
    %p110 = por %p108, %p109
    %p111 = scmp.ne.s32.totalorder %s103, %s106
    %p112 = scmp.eq.s32.totalorder %s9, 0
    %p113 = por %p111, %p112
    %p114 = scmp.ne.s32.totalorder %s103, %s106
    %p115 = scmp.eq.s32.totalorder %s14, 3
    %p116 = por %p114, %p115
    %p117 = scmp.ne.s32.totalorder %s106, %s107
    %p118 = scmp.eq.s32.totalorder %s14, 0
    %p119 = por %p117, %p118
    %p120 = scmp.ne.s32.totalorder %s106, %s107
    %p121 = scmp.eq.s32.totalorder %s15, 3
    %p122 = por %p120, %p121
    %p124 = scmp.ne.s32.totalorder %s107, %s123
    %p125 = scmp.eq.s32.totalorder %s15, 0
    %p126 = por %p124, %p125
    %p127 = scmp.le.s32.totalorder 1, %s9
    %p128 = scmp.lt.s32.totalorder %s9, 5
    %p129 = pnand %p127, %p128
    %p130 = pneg %p129
    // Predicated region
    $region9: #{upconv_forward.3} parent=5 // pred_check
      _
    $region10: #{upconv_forward.3} parent=5 // pred_check_branch
      %132 = sbr.rel (%p129) target = $region12
    $region11: #{upconv_forward.3} parent=5 // pred_region
      %s133 = ssub.s32 %s9, 1
      // Predicated region
      $region13: #{upconv_forward.3} parent=11 // pred_check
        %p134 = pneg %p70
      $region14: #{upconv_forward.3} parent=11 // pred_check_branch
        %136 = sbr.rel (%p134) target = $region16
      $region15: #{upconv_forward.3} parent=11 // pred_region
        _
      $region16: #{upconv_forward.3} parent=11 // pred_fallthru
        _
      // Predicated region
      $region17: #{upconv_forward.3} parent=11 // pred_check
        %p137 = pneg %p91
      $region18: #{upconv_forward.3} parent=11 // pred_check_branch
        %139 = sbr.rel (%p137) target = $region20
      $region19: #{upconv_forward.3} parent=11 // pred_region
        _
      $region20: #{upconv_forward.3} parent=11 // pred_fallthru
        _
    $region12: #{upconv_forward.3} parent=5 // pred_fallthru
      _
    %p140 = scmp.lt.s32.totalorder %s9, 4
    // Predicated region
    $region21: #{upconv_forward.3} parent=5 // pred_check
      %p141 = pneg %p140
    $region22: #{upconv_forward.3} parent=5 // pred_check_branch
      %143 = sbr.rel (%p141) target = $region24
    $region23: #{upconv_forward.3} parent=5 // pred_region
      // Predicated region
      $region25: #{upconv_forward.3} parent=23 // pred_check
        %p144 = pneg %p43
      $region26: #{upconv_forward.3} parent=23 // pred_check_branch
        %146 = sbr.rel (%p144) target = $region28
      $region27: #{upconv_forward.3} parent=23 // pred_region
        %s147 = smul.u32 4, %s17
        %p148 = scmp.lt.s32.totalorder %s16, 3
        %s149 = scalar_select %p148, %s16, 3
        %p150 = scmp.lt.s32.totalorder %s147, 3
        %s151 = scalar_select %p150, %s147, 3
        %s152 = smul.addr %s149, 4
        %s153 = sadd.s32 %s151, %s152
        %s154 = smul.addr %s153, 8
        %s155 = scalar_lea.vmem %s0, %s154
        %s156 = smul.u32 4, %s17
      $region28: #{upconv_forward.3} parent=23 // pred_fallthru
        _
    $region24: #{upconv_forward.3} parent=5 // pred_fallthru
      _
    %p157 = scmp.le.s32.totalorder 1, %s9
    %p158 = scmp.lt.s32.totalorder %s9, 5
    %p159 = pnand %p157, %p158
    %p160 = pneg %p159
    // Predicated region
    $region29: #{upconv_forward.3} parent=5 // pred_check
      _
    $region30: #{upconv_forward.3} parent=5 // pred_check_branch
      %162 = sbr.rel (%p159) target = $region32
    $region31: #{upconv_forward.3} parent=5 // pred_region
      %s163 = ssub.s32 %s9, 1
      %s164 = smul.u32 4, %s19
      %p165 = scmp.lt.s32.totalorder %s18, 3
      %s166 = scalar_select %p165, %s18, 3
      %p167 = scmp.lt.s32.totalorder %s164, 3
      %s168 = scalar_select %p167, %s164, 3
      %s169 = smul.addr %s166, 4
      %s170 = sadd.s32 %s168, %s169
      %s171 = smul.addr %s170, 8
      %s172 = scalar_lea.vmem %s0, %s171
      %p173 = pneg %p49
      %p174 = pneg %p46
      %p175 = pneg %p70
      %p176 = pneg %p67
      %p177 = pneg %p91
      %p178 = pneg %p88
      %p179 = pneg %p119
      %p180 = pneg %p116
      %s181 = smul.u32 4, %s19
      %p182 = scmp.lt.s32.totalorder %s18, 3
      %s183 = scalar_select %p182, %s18, 3
      %p184 = scmp.lt.s32.totalorder %s181, 3
      %s185 = scalar_select %p184, %s181, 3
      %s186 = smul.addr %s183, 4
      %s187 = sadd.s32 %s185, %s186
      %s188 = smul.addr %s187, 8
      %s189 = scalar_lea.vmem %s3, %s188
      %s190 = smul.u32 4, %s19
      %p191 = scmp.lt.s32.totalorder %s18, 3
      %s192 = scalar_select %p191, %s18, 3
      %p193 = scmp.lt.s32.totalorder %s190, 3
      %s194 = scalar_select %p193, %s190, 3
      %s195 = smul.addr %s192, 4
      %s196 = sadd.s32 %s194, %s195
      %s197 = smul.addr %s196, 8
      %s198 = scalar_lea.vmem %s0, %s197
      %s199 = smul.u32 4, %s19
      %s200 = smul.u32 4, %s19
      %p201 = scmp.lt.s32.totalorder %s18, 3
      %s202 = scalar_select %p201, %s18, 3
      %p203 = scmp.lt.s32.totalorder %s200, 3
      %s204 = scalar_select %p203, %s200, 3
      %s205 = smul.addr %s202, 4
      %s206 = sadd.s32 %s204, %s205
      %s207 = smul.addr %s206, 8
      %s208 = scalar_lea.vmem %s3, %s207
      %s209 = smul.u32 4, %s19
      %v210 = vld [vmem:[%s198] sm:$0xff]
      %v211 = vld [vmem:[%s198 + $0x8] sm:$0xff]
      %v212 = vld [vmem:[%s198 + $0x10] sm:$0xff]
      %v213 = vld [vmem:[%s198 + $0x18] sm:$0xff]
      %v214 = vld [vmem:[%s1] sm:$0xff]
      %216 = vset.pattern.permute.xlu0 0
      %217 = vperm.xlu0 %216, %v214
      %v218 = vpop.permute.xlu0 %217
      %v220 = vmul.f32 %v210, %v218
      %v221 = vmul.f32 %v211, %v218
      %v222 = vmul.f32 %v212, %v218
      %v223 = vmul.f32 %v213, %v218
      %v224 = vld [vmem:[%s2] sm:$0xff]
      %226 = vset.pattern.permute.xlu0 0
      %227 = vperm.xlu0 %226, %v224
      %v228 = vpop.permute.xlu0 %227
      %v230 = vadd.f32 %v220, %v228
      %v231 = vadd.f32 %v221, %v228
      %v232 = vadd.f32 %v222, %v228
      %v233 = vadd.f32 %v223, %v228
      %v234 = vmax.f32 %v230, 0.0
      %v235 = vmax.f32 %v231, 0.0
      %v236 = vmax.f32 %v232, 0.0
      %v237 = vmax.f32 %v233, 0.0
      %238 = vst [vmem:[%s208] sm:$0xff] %v234
      %239 = vst [vmem:[%s208 + $0x8] sm:$0xff] %v235
      %240 = vst [vmem:[%s208 + $0x10] sm:$0xff] %v236
      %241 = vst [vmem:[%s208 + $0x18] sm:$0xff] %v237
      %s242 = smul.u32 4, %s19
      %p243 = scmp.lt.s32.totalorder %s18, 3
      %s244 = scalar_select %p243, %s18, 3
      %p245 = scmp.lt.s32.totalorder %s242, 3
      %s246 = scalar_select %p245, %s242, 3
      %s247 = smul.addr %s244, 4
      %s248 = sadd.s32 %s246, %s247
      %s249 = smul.addr %s248, 8
      %s250 = scalar_lea.vmem %s3, %s249
      // Predicated region
      $region33: #{upconv_forward.3} parent=31 // pred_check
        %p251 = pneg %p116
      $region34: #{upconv_forward.3} parent=31 // pred_check_branch
        %253 = sbr.rel (%p251) target = $region36
      $region35: #{upconv_forward.3} parent=31 // pred_region
        %s254 = smul.u32 4, %s19
      $region36: #{upconv_forward.3} parent=31 // pred_fallthru
        _
    $region32: #{upconv_forward.3} parent=5 // pred_fallthru
      _
    %p255 = scmp.le.s32.totalorder 2, %s9
    // Predicated region
    $region37: #{upconv_forward.3} parent=5 // pred_check
      %p256 = pneg %p255
    $region38: #{upconv_forward.3} parent=5 // pred_check_branch
      %258 = sbr.rel (%p256) target = $region40
    $region39: #{upconv_forward.3} parent=5 // pred_region
      %s259 = ssub.s32 %s9, 2
      // Predicated region
      $region41: #{upconv_forward.3} parent=39 // pred_check
        %p260 = pneg %p122
      $region42: #{upconv_forward.3} parent=39 // pred_check_branch
        %262 = sbr.rel (%p260) target = $region44
      $region43: #{upconv_forward.3} parent=39 // pred_region
        %s263 = smul.u32 4, %s21
        %p264 = scmp.lt.s32.totalorder %s20, 3
        %s265 = scalar_select %p264, %s20, 3
        %p266 = scmp.lt.s32.totalorder %s263, 3
        %s267 = scalar_select %p266, %s263, 3
        %s268 = smul.addr %s265, 4
        %s269 = sadd.s32 %s267, %s268
        %s270 = smul.addr %s269, 8
        %s271 = scalar_lea.vmem %s3, %s270
      $region44: #{upconv_forward.3} parent=39 // pred_fallthru
        _
    $region40: #{upconv_forward.3} parent=5 // pred_fallthru
      _
  $region6: #{upconv_forward.3} parent=0 // loop_footer
    %s13 = sadd.s32 1, %s9
  $region7: #{upconv_forward.3} parent=0 // loop_footer_branch
    %8 = sbr.rel target = $region3
  $region8: #{upconv_forward.3} parent=0 // loop_exit
    _

// kernel: upconv_forward.2
$region0: #{upconv_forward.2}
  #allocation0 [shape = 'u32[]', space=smem, size = 0x4, offset = 0x4, fixed_abs, tag = 'smem constant byte address 0x4 - core index']
  #allocation1 [shape = 'u32[144,128]{1,0:T(1,128)}', space=vmem, size = 0x12000, scoped, tag = 'internal scratch']
  %s0 = inlined_call_operand.vmem [shape: f32[4,16,512], index: 0, kind: input, shape index: {}]
  %s1 = inlined_call_operand.vmem [shape: f32[4,8,16], index: 1, kind: input, shape index: {}]
  %s2 = inlined_call_operand.vmem [shape: f32[4,8,512], index: 2, kind: output, shape index: {0}]
  %s3 = inlined_call_operand.vmem [shape: f32[4,1,8,1], index: 3, kind: output, shape index: {1}]
  %s4 = inlined_call_operand.vmem [shape: f32[4,1,8,1], index: 4, kind: output, shape index: {2}]
  %5 = xla_tuple %s2, %s3, %s4
  %s6 = sld [smem:[#allocation0]]
  $region57: #{upconv_forward.2} parent=0
    _
  %s8 = ssub.s32 1, %s6
  %s9 = scalar_select 0, %s8, %s6
  loop: start=0, step=1, limit=6
  $region2: #{upconv_forward.2} parent=0 // loop_pre_header
    _
  $region3: #{upconv_forward.2} parent=0 // loop_header
    %s11 = sphi 0, %s15
    %p12 = scmp.ge.s32.totalorder %s11, 6
    %s18 = sphi 0, %s30
    %s19 = sphi 0, %s26
    %s20 = sphi 0, %s18
    %s21 = sphi 0, %s19
    %s22 = sphi 0, %s20
    %s23 = sphi 0, %s21
    %s35 = sphi 0, %s37
    %s38 = sphi 0, %s35
    %s39 = sphi 0, %s38
    %s55 = sphi 0, %s39
    %s61 = sphi 0, %s63
    %s64 = sphi 0, %s61
    %s65 = sphi 0, %s64
    %s81 = sphi 0, %s65
    %s89 = sphi 0, %s91
    %s92 = sphi 0, %s89
    %s93 = sphi 0, %s92
    %s109 = sphi 0, %s93
    %s117 = sphi 0, %s119
    %s120 = sphi 0, %s117
    %s121 = sphi 0, %s120
    %s137 = sphi 0, %s121
    %s145 = sphi 0, %s147
    %s148 = sphi 0, %s145
    %s149 = sphi 0, %s148
    %s165 = sphi 0, %s149
  $region4: #{upconv_forward.2} parent=0 // loop_header_branch
    %14 = sbr.rel (%p12) target = $region8
  $region5: #{upconv_forward.2} parent=0 // loop_body
    %s16 = ssub.s32 %s11, 1
    %s17 = ssub.s32 %s11, 2
    %s24 = sadd.s32 1, %s19
    %p25 = scmp.ge.s32.totalorder %s24, 1
    %s26 = scalar_select %p25, 0, %s24
    %s27 = sadd.s32 1, %s18
    %s28 = scalar_select %p25, %s27, %s18
    %p29 = scmp.ge.s32.totalorder %s28, 4
    %s30 = scalar_select %p29, 0, %s28
    %s31 = ssub.s32 %s18, %s30
    %s32 = ssub.s32 %s19, %s26
    %s33 = sor.u32 %s31, %s32
    %p34 = scmp.eq.s32.totalorder %s33, 0
    %s36 = sadd.s32 %s35, 1
    %s37 = scalar_select %p34, %s35, %s36
    %p40 = pneg %p34
    %p41 = scmp.eq.s32.totalorder %s11, 3
    %p42 = por %p40, %p41
    %p43 = scmp.ne.s32.totalorder %s35, %s38
    %p44 = scmp.eq.s32.totalorder %s11, 0
    %p45 = por %p43, %p44
    %p46 = scmp.ne.s32.totalorder %s35, %s38
    %p47 = scmp.eq.s32.totalorder %s16, 3
    %p48 = por %p46, %p47
    %p49 = scmp.ne.s32.totalorder %s38, %s39
    %p50 = scmp.eq.s32.totalorder %s16, 0
    %p51 = por %p49, %p50
    %p52 = scmp.ne.s32.totalorder %s38, %s39
    %p53 = scmp.eq.s32.totalorder %s17, 3
    %p54 = por %p52, %p53
    %p56 = scmp.ne.s32.totalorder %s39, %s55
    %p57 = scmp.eq.s32.totalorder %s17, 0
    %p58 = por %p56, %p57
    %s59 = ssub.s32 %s18, %s30
    %p60 = scmp.eq.s32.totalorder %s59, 0
    %s62 = sadd.s32 %s61, 1
    %s63 = scalar_select %p60, %s61, %s62
    %p66 = pneg %p60
    %p67 = scmp.eq.s32.totalorder %s11, 3
    %p68 = por %p66, %p67
    %p69 = scmp.ne.s32.totalorder %s61, %s64
    %p70 = scmp.eq.s32.totalorder %s11, 0
    %p71 = por %p69, %p70
    %p72 = scmp.ne.s32.totalorder %s61, %s64
    %p73 = scmp.eq.s32.totalorder %s16, 3
    %p74 = por %p72, %p73
    %p75 = scmp.ne.s32.totalorder %s64, %s65
    %p76 = scmp.eq.s32.totalorder %s16, 0
    %p77 = por %p75, %p76
    %p78 = scmp.ne.s32.totalorder %s64, %s65
    %p79 = scmp.eq.s32.totalorder %s17, 3
    %p80 = por %p78, %p79
    %p82 = scmp.ne.s32.totalorder %s65, %s81
    %p83 = scmp.eq.s32.totalorder %s17, 0
    %p84 = por %p82, %p83
    %s85 = ssub.s32 %s18, %s30
    %s86 = ssub.s32 %s19, %s26
    %s87 = sor.u32 %s85, %s86
    %p88 = scmp.eq.s32.totalorder %s87, 0
    %s90 = sadd.s32 %s89, 1
    %s91 = scalar_select %p88, %s89, %s90
    %p94 = pneg %p88
    %p95 = scmp.eq.s32.totalorder %s11, 3
    %p96 = por %p94, %p95
    %p97 = scmp.ne.s32.totalorder %s89, %s92
    %p98 = scmp.eq.s32.totalorder %s11, 0
    %p99 = por %p97, %p98
    %p100 = scmp.ne.s32.totalorder %s89, %s92
    %p101 = scmp.eq.s32.totalorder %s16, 3
    %p102 = por %p100, %p101
    %p103 = scmp.ne.s32.totalorder %s92, %s93
    %p104 = scmp.eq.s32.totalorder %s16, 0
    %p105 = por %p103, %p104
    %p106 = scmp.ne.s32.totalorder %s92, %s93
    %p107 = scmp.eq.s32.totalorder %s17, 3
    %p108 = por %p106, %p107
    %p110 = scmp.ne.s32.totalorder %s93, %s109
    %p111 = scmp.eq.s32.totalorder %s17, 0
    %p112 = por %p110, %p111
    %s113 = ssub.s32 %s18, %s30
    %s114 = ssub.s32 %s19, %s26
    %s115 = sor.u32 %s113, %s114
    %p116 = scmp.eq.s32.totalorder %s115, 0
    %s118 = sadd.s32 %s117, 1
    %s119 = scalar_select %p116, %s117, %s118
    %p122 = pneg %p116
    %p123 = scmp.eq.s32.totalorder %s11, 3
    %p124 = por %p122, %p123
    %p125 = scmp.ne.s32.totalorder %s117, %s120
    %p126 = scmp.eq.s32.totalorder %s11, 0
    %p127 = por %p125, %p126
    %p128 = scmp.ne.s32.totalorder %s117, %s120
    %p129 = scmp.eq.s32.totalorder %s16, 3
    %p130 = por %p128, %p129
    %p131 = scmp.ne.s32.totalorder %s120, %s121
    %p132 = scmp.eq.s32.totalorder %s16, 0
    %p133 = por %p131, %p132
    %p134 = scmp.ne.s32.totalorder %s120, %s121
    %p135 = scmp.eq.s32.totalorder %s17, 3
    %p136 = por %p134, %p135
    %p138 = scmp.ne.s32.totalorder %s121, %s137
    %p139 = scmp.eq.s32.totalorder %s17, 0
    %p140 = por %p138, %p139
    %s141 = ssub.s32 %s18, %s30
    %s142 = ssub.s32 %s19, %s26
    %s143 = sor.u32 %s141, %s142
    %p144 = scmp.eq.s32.totalorder %s143, 0
    %s146 = sadd.s32 %s145, 1
    %s147 = scalar_select %p144, %s145, %s146
    %p150 = pneg %p144
    %p151 = scmp.eq.s32.totalorder %s11, 3
    %p152 = por %p150, %p151
    %p153 = scmp.ne.s32.totalorder %s145, %s148
    %p154 = scmp.eq.s32.totalorder %s11, 0
    %p155 = por %p153, %p154
    %p156 = scmp.ne.s32.totalorder %s145, %s148
    %p157 = scmp.eq.s32.totalorder %s16, 3
    %p158 = por %p156, %p157
    %p159 = scmp.ne.s32.totalorder %s148, %s149
    %p160 = scmp.eq.s32.totalorder %s16, 0
    %p161 = por %p159, %p160
    %p162 = scmp.ne.s32.totalorder %s148, %s149
    %p163 = scmp.eq.s32.totalorder %s17, 3
    %p164 = por %p162, %p163
    %p166 = scmp.ne.s32.totalorder %s149, %s165
    %p167 = scmp.eq.s32.totalorder %s17, 0
    %p168 = por %p166, %p167
    %p169 = scmp.le.s32.totalorder 1, %s11
    %p170 = scmp.lt.s32.totalorder %s11, 5
    %p171 = pnand %p169, %p170
    %p172 = pneg %p171
    // Predicated region
    $region9: #{upconv_forward.2} parent=5 // pred_check
      _
    $region10: #{upconv_forward.2} parent=5 // pred_check_branch
      %174 = sbr.rel (%p171) target = $region12
    $region11: #{upconv_forward.2} parent=5 // pred_region
      %s175 = ssub.s32 %s11, 1
    $region12: #{upconv_forward.2} parent=5 // pred_fallthru
      _
    %p176 = scmp.lt.s32.totalorder %s11, 4
    // Predicated region
    $region13: #{upconv_forward.2} parent=5 // pred_check
      %p177 = pneg %p176
    $region14: #{upconv_forward.2} parent=5 // pred_check_branch
      %179 = sbr.rel (%p177) target = $region16
    $region15: #{upconv_forward.2} parent=5 // pred_region
      // Predicated region
      $region17: #{upconv_forward.2} parent=15 // pred_check
        %p180 = pneg %p45
      $region18: #{upconv_forward.2} parent=15 // pred_check_branch
        %182 = sbr.rel (%p180) target = $region20
      $region19: #{upconv_forward.2} parent=15 // pred_region
        %s183 = smul.u32 4, %s19
        %p184 = scmp.lt.s32.totalorder %s18, 3
        %s185 = scalar_select %p184, %s18, 3
        %p186 = scmp.lt.s32.totalorder %s183, 3
        %s187 = scalar_select %p186, %s183, 3
        %s188 = smul.addr %s185, 8
        %s189 = sadd.s32 %s187, %s188
        %s190 = smul.addr %s189, 8
        %s191 = scalar_lea.vmem %s0, %s190
        %s192 = smul.u32 4, %s19
      $region20: #{upconv_forward.2} parent=15 // pred_fallthru
        _
      // Predicated region
      $region21: #{upconv_forward.2} parent=15 // pred_check
        %p193 = pneg %p71
      $region22: #{upconv_forward.2} parent=15 // pred_check_branch
        %195 = sbr.rel (%p193) target = $region24
      $region23: #{upconv_forward.2} parent=15 // pred_region
        %p196 = scmp.lt.s32.totalorder %s18, 3
        %s197 = scalar_select %p196, %s18, 3
        %s198 = smul.addr %s197, 8
        %s199 = scalar_lea.vmem %s1, %s198
      $region24: #{upconv_forward.2} parent=15 // pred_fallthru
        _
    $region16: #{upconv_forward.2} parent=5 // pred_fallthru
      _
    %p200 = scmp.le.s32.totalorder 1, %s11
    %p201 = scmp.lt.s32.totalorder %s11, 5
    %p202 = pnand %p200, %p201
    %p203 = pneg %p202
    // Predicated region
    $region25: #{upconv_forward.2} parent=5 // pred_check
      _
    $region26: #{upconv_forward.2} parent=5 // pred_check_branch
      %205 = sbr.rel (%p202) target = $region28
    $region27: #{upconv_forward.2} parent=5 // pred_region
      %s206 = ssub.s32 %s11, 1
      %s207 = smul.u32 4, %s21
      %p208 = scmp.lt.s32.totalorder %s20, 3
      %s209 = scalar_select %p208, %s20, 3
      %p210 = scmp.lt.s32.totalorder %s207, 3
      %s211 = scalar_select %p210, %s207, 3
      %s212 = smul.addr %s209, 8
      %s213 = sadd.s32 %s211, %s212
      %s214 = smul.addr %s213, 8
      %s215 = scalar_lea.vmem %s0, %s214
      %p216 = pneg %p51
      %p217 = pneg %p48
      %p218 = scmp.lt.s32.totalorder %s20, 3
      %s219 = scalar_select %p218, %s20, 3
      %s220 = smul.addr %s219, 8
      %s221 = scalar_lea.vmem %s1, %s220
      %p222 = pneg %p77
      %p223 = pneg %p74
      %p224 = pneg %p105
      %p225 = pneg %p102
      %s226 = smul.u32 4, %s21
      %p227 = scmp.lt.s32.totalorder %s20, 3
      %s228 = scalar_select %p227, %s20, 3
      %p229 = scmp.lt.s32.totalorder %s226, 3
      %s230 = scalar_select %p229, %s226, 3
      %s231 = smul.addr %s228, 4
      %s232 = sadd.s32 %s230, %s231
      %s233 = smul.addr %s232, 8
      %s234 = scalar_lea.vmem %s2, %s233
      %p235 = pneg %p133
      %p236 = pneg %p130
      %p237 = scmp.lt.s32.totalorder %s20, 3
      %s238 = scalar_select %p237, %s20, 3
      %p239 = scmp.lt.s32.totalorder %s21, 0
      %s240 = scalar_select %p239, %s21, 0
      %s241 = sadd.s32 %s240, %s238
      %s242 = smul.addr %s241, 8
      %s243 = scalar_lea.vmem %s3, %s242
      %p244 = pneg %p161
      %p245 = pneg %p158
      %p246 = scmp.lt.s32.totalorder %s20, 3
      %s247 = scalar_select %p246, %s20, 3
      %p248 = scmp.lt.s32.totalorder %s21, 0
      %s249 = scalar_select %p248, %s21, 0
      %s250 = sadd.s32 %s249, %s247
      %s251 = smul.addr %s250, 8
      %s252 = scalar_lea.vmem %s4, %s251
      %s253 = smul.u32 4, %s21
      %p254 = scmp.lt.s32.totalorder %s20, 3
      %s255 = scalar_select %p254, %s20, 3
      %p256 = scmp.lt.s32.totalorder %s253, 3
      %s257 = scalar_select %p256, %s253, 3
      %s258 = smul.addr %s255, 8
      %s259 = sadd.s32 %s257, %s258
      %s260 = smul.addr %s259, 8
      %s261 = scalar_lea.vmem %s0, %s260
      %s262 = smul.u32 4, %s21
      %p263 = scmp.lt.s32.totalorder %s20, 3
      %s264 = scalar_select %p263, %s20, 3
      %s265 = smul.addr %s264, 8
      %s266 = scalar_lea.vmem %s1, %s265
      %s267 = smul.u32 4, %s21
      %p268 = scmp.lt.s32.totalorder %s20, 3
      %s269 = scalar_select %p268, %s20, 3
      %p270 = scmp.lt.s32.totalorder %s267, 3
      %s271 = scalar_select %p270, %s267, 3
      %s272 = smul.addr %s269, 4
      %s273 = sadd.s32 %s271, %s272
      %s274 = smul.addr %s273, 8
      %s275 = scalar_lea.vmem %s2, %s274
      %s276 = smul.u32 4, %s21
      %p277 = scmp.lt.s32.totalorder %s20, 3
      %s278 = scalar_select %p277, %s20, 3
      %p279 = scmp.lt.s32.totalorder %s21, 0
      %s280 = scalar_select %p279, %s21, 0
      %s281 = sadd.s32 %s280, %s278
      %s282 = smul.addr %s281, 8
      %s283 = scalar_lea.vmem %s3, %s282
      %p284 = scmp.lt.s32.totalorder %s20, 3
      %s285 = scalar_select %p284, %s20, 3
      %p286 = scmp.lt.s32.totalorder %s21, 0
      %s287 = scalar_select %p286, %s21, 0
      %s288 = sadd.s32 %s287, %s285
      %s289 = smul.addr %s288, 8
      %s290 = scalar_lea.vmem %s4, %s289
      %v291 = vld [vmem:[%s266] sm:$0xff]
      %v292 = vld [vmem:[%s261] sm:$0xff]
      %v293 = vld [vmem:[%s261 + $0x8] sm:$0xff]
      %v294 = vld [vmem:[%s261 + $0x10] sm:$0xff]
      %v295 = vld [vmem:[%s261 + $0x18] sm:$0xff]
      %v296 = vld [vmem:[%s261 + $0x20] sm:$0xff]
      %v297 = vld [vmem:[%s261 + $0x28] sm:$0xff]
      %v298 = vld [vmem:[%s261 + $0x30] sm:$0xff]
      %v299 = vld [vmem:[%s261 + $0x38] sm:$0xff]
      %vm300 = vcmask 130048
      %v302 = vsel %vm300, %v291, 0
      %304 = vmatprep.subr.mxu0 0.0
      %305 = vmatpush1.msra.mxu0 0.0
      %306 = vmatprep.subr.mxu0 0.0
      %307 = vmatpush1.msra.mxu0 0.0
      %308 = vmatprep.subr.mxu0 0.0
      %309 = vmatpush1.msra.mxu0 0.0
      %310 = vmatprep.subr.mxu0 0.0
      %311 = vmatpush1.msra.mxu0 0.0
      %312 = vmatprep.subr.mxu0 0.0
      %313 = vmatpush1.msra.mxu0 0.0
      %314 = vmatprep.subr.mxu0 0.0
      %315 = vmatpush1.msra.mxu0 0.0
      %316 = vmatprep.subr.mxu0 0.0
      %317 = vmatpush1.msra.mxu0 0.0
      %318 = vmatprep.subr.mxu0 0.0
      %319 = vmatpush1.msra.mxu0 0.0
      %320 = vmatprep.subr.mxu0 0.0
      %321 = vmatpush1.msra.mxu0 0.0
      %322 = vmatprep.subr.mxu0 0.0
      %323 = vmatpush1.msra.mxu0 0.0
      %324 = vmatprep.subr.mxu0 0.0
      %325 = vmatpush1.msra.mxu0 0.0
      %326 = vmatprep.subr.mxu0 0.0
      %327 = vmatpush1.msra.mxu0 0.0
      %328 = vmatprep.subr.mxu0 0.0
      %329 = vmatpush1.msra.mxu0 0.0
      %330 = vmatprep.subr.mxu0 0.0
      %331 = vmatpush1.msra.mxu0 0.0
      %332 = vmatprep.subr.mxu0 %v297
      %333 = vmatpush1.msra.mxu0 %v296
      %334 = vmatprep.subr.mxu0 %v293
      %335 = vmatpush1.msra.mxu0 %v292
      %336 = vmatprep.subr.mxu0 0.0
      %337 = vmatpush2.msra.mxu0 0.0
      %338 = vmatprep.subr.mxu0 0.0
      %339 = vmatpush2.msra.mxu0 0.0
      %340 = vmatprep.subr.mxu0 0.0
      %341 = vmatpush2.msra.mxu0 0.0
      %342 = vmatprep.subr.mxu0 0.0
      %343 = vmatpush2.msra.mxu0 0.0
      %344 = vmatprep.subr.mxu0 0.0
      %345 = vmatpush2.msra.mxu0 0.0
      %346 = vmatprep.subr.mxu0 0.0
      %347 = vmatpush2.msra.mxu0 0.0
      %348 = vmatprep.subr.mxu0 0.0
      %349 = vmatpush2.msra.mxu0 0.0
      %350 = vmatprep.subr.mxu0 0.0
      %351 = vmatpush2.msra.mxu0 0.0
      %352 = vmatprep.subr.mxu0 0.0
      %353 = vmatpush2.msra.mxu0 0.0
      %354 = vmatprep.subr.mxu0 0.0
      %355 = vmatpush2.msra.mxu0 0.0
      %356 = vmatprep.subr.mxu0 0.0
      %357 = vmatpush2.msra.mxu0 0.0
      %358 = vmatprep.subr.mxu0 0.0
      %359 = vmatpush2.msra.mxu0 0.0
      %360 = vmatprep.subr.mxu0 0.0
      %361 = vmatpush2.msra.mxu0 0.0
      %362 = vmatprep.subr.mxu0 0.0
      %363 = vmatpush2.msra.mxu0 0.0
      %364 = vmatprep.subr.mxu0 0.0
      %365 = vmatpush2.msra.mxu0 0.0
      %366 = vmatprep.subr.mxu0 0.0
      %367 = vmatpush2.msra.mxu0 0.0
      %368 = vmatprep.mubr.f32.mxu0 0.0
      %369 = vmatmul.mubr.f32.gmra.mxu0 %v302
      %v370 = vpop.f32.mrf.mxu0
      %v371 = vadd.f32 0.0, %v370
      %v372 = vpop.f32.mrf.mxu0
      %v373 = vadd.f32 0.0, %v372
      %374 = vdwg.mxu0
      %375 = vmatprep.subr.mxu0 0.0
      %376 = vmatpush1.msra.mxu0 0.0
      %377 = vmatprep.subr.mxu0 0.0
      %378 = vmatpush1.msra.mxu0 0.0
      %379 = vmatprep.subr.mxu0 0.0
      %380 = vmatpush1.msra.mxu0 0.0
      %381 = vmatprep.subr.mxu0 0.0
      %382 = vmatpush1.msra.mxu0 0.0
      %383 = vmatprep.subr.mxu0 0.0
      %384 = vmatpush1.msra.mxu0 0.0
      %385 = vmatprep.subr.mxu0 0.0
      %386 = vmatpush1.msra.mxu0 0.0
      %387 = vmatprep.subr.mxu0 0.0
      %388 = vmatpush1.msra.mxu0 0.0
      %389 = vmatprep.subr.mxu0 0.0
      %390 = vmatpush1.msra.mxu0 0.0
      %391 = vmatprep.subr.mxu0 0.0
      %392 = vmatpush1.msra.mxu0 0.0
      %393 = vmatprep.subr.mxu0 0.0
      %394 = vmatpush1.msra.mxu0 0.0
      %395 = vmatprep.subr.mxu0 0.0
      %396 = vmatpush1.msra.mxu0 0.0
      %397 = vmatprep.subr.mxu0 0.0
      %398 = vmatpush1.msra.mxu0 0.0
      %399 = vmatprep.subr.mxu0 0.0
      %400 = vmatpush1.msra.mxu0 0.0
      %401 = vmatprep.subr.mxu0 0.0
      %402 = vmatpush1.msra.mxu0 0.0
      %403 = vmatprep.subr.mxu0 %v299
      %404 = vmatpush1.msra.mxu0 %v298
      %405 = vmatprep.subr.mxu0 %v295
      %406 = vmatpush1.msra.mxu0 %v294
      %407 = vmatprep.subr.mxu0 0.0
      %408 = vmatpush2.msra.mxu0 0.0
      %409 = vmatprep.subr.mxu0 0.0
      %410 = vmatpush2.msra.mxu0 0.0
      %411 = vmatprep.subr.mxu0 0.0
      %412 = vmatpush2.msra.mxu0 0.0
      %413 = vmatprep.subr.mxu0 0.0
      %414 = vmatpush2.msra.mxu0 0.0
      %415 = vmatprep.subr.mxu0 0.0
      %416 = vmatpush2.msra.mxu0 0.0
      %417 = vmatprep.subr.mxu0 0.0
      %418 = vmatpush2.msra.mxu0 0.0
      %419 = vmatprep.subr.mxu0 0.0
      %420 = vmatpush2.msra.mxu0 0.0
      %421 = vmatprep.subr.mxu0 0.0
      %422 = vmatpush2.msra.mxu0 0.0
      %423 = vmatprep.subr.mxu0 0.0
      %424 = vmatpush2.msra.mxu0 0.0
      %425 = vmatprep.subr.mxu0 0.0
      %426 = vmatpush2.msra.mxu0 0.0
      %427 = vmatprep.subr.mxu0 0.0
      %428 = vmatpush2.msra.mxu0 0.0
      %429 = vmatprep.subr.mxu0 0.0
      %430 = vmatpush2.msra.mxu0 0.0
      %431 = vmatprep.subr.mxu0 0.0
      %432 = vmatpush2.msra.mxu0 0.0
      %433 = vmatprep.subr.mxu0 0.0
      %434 = vmatpush2.msra.mxu0 0.0
      %435 = vmatprep.subr.mxu0 0.0
      %436 = vmatpush2.msra.mxu0 0.0
      %437 = vmatprep.subr.mxu0 0.0
      %438 = vmatpush2.msra.mxu0 0.0
      %439 = vmatprep.mubr.f32.mxu0 0.0
      %440 = vmatmul.mubr.f32.gmra.mxu0 %v302
      %v441 = vpop.f32.mrf.mxu0
      %v442 = vadd.f32 0.0, %v441
      %v443 = vpop.f32.mrf.mxu0
      %v444 = vadd.f32 0.0, %v443
      %445 = vdwg.mxu0
      %446 = vst [vmem:[%s275] sm:$0xff] %v371
      %447 = vst [vmem:[%s275 + $0x8] sm:$0xff] %v373
      %448 = vst [vmem:[%s275 + $0x10] sm:$0xff] %v442
      %449 = vst [vmem:[%s275 + $0x18] sm:$0xff] %v444
      %v450 = vadd.f32 %v371, %v373
      %v451 = vadd.f32 %v450, %v442
      %v452 = vadd.f32 %v451, %v444
      %453 = vadd.xlane.f32.xlu0 %v452
      %v454 = vpop.xlane.xlu0 %453
      %vm455 = vcmask 7168
      %456 = vst.msk [vmem:[%s283] sm:$0xff] %vm455, %v454
      %v457 = vmul.f32 %v371, %v371
      %v458 = vmul.f32 %v373, %v373
      %v459 = vmul.f32 %v442, %v442
      %v460 = vmul.f32 %v444, %v444
      %v461 = vadd.f32 %v457, %v458
      %v462 = vadd.f32 %v461, %v459
      %v463 = vadd.f32 %v462, %v460
      %464 = vadd.xlane.f32.xlu0 %v463
      %v465 = vpop.xlane.xlu0 %464
      %466 = vst.msk [vmem:[%s290] sm:$0xff] %vm455, %v465
      %s467 = smul.u32 4, %s21
      %p468 = scmp.lt.s32.totalorder %s20, 3
      %s469 = scalar_select %p468, %s20, 3
      %p470 = scmp.lt.s32.totalorder %s467, 3
      %s471 = scalar_select %p470, %s467, 3
      %s472 = smul.addr %s469, 4
      %s473 = sadd.s32 %s471, %s472
      %s474 = smul.addr %s473, 8
      %s475 = scalar_lea.vmem %s2, %s474
      %p476 = scmp.lt.s32.totalorder %s20, 3
      %s477 = scalar_select %p476, %s20, 3
      %p478 = scmp.lt.s32.totalorder %s21, 0
      %s479 = scalar_select %p478, %s21, 0
      %s480 = sadd.s32 %s479, %s477
      %s481 = smul.addr %s480, 8
      %s482 = scalar_lea.vmem %s3, %s481
      %p483 = scmp.lt.s32.totalorder %s20, 3
      %s484 = scalar_select %p483, %s20, 3
      %p485 = scmp.lt.s32.totalorder %s21, 0
      %s486 = scalar_select %p485, %s21, 0
      %s487 = sadd.s32 %s486, %s484
      %s488 = smul.addr %s487, 8
      %s489 = scalar_lea.vmem %s4, %s488
      // Predicated region
      $region29: #{upconv_forward.2} parent=27 // pred_check
        %p490 = pneg %p102
      $region30: #{upconv_forward.2} parent=27 // pred_check_branch
        %492 = sbr.rel (%p490) target = $region32
      $region31: #{upconv_forward.2} parent=27 // pred_region
        %s493 = smul.u32 4, %s21
      $region32: #{upconv_forward.2} parent=27 // pred_fallthru
        _
      // Predicated region
      $region33: #{upconv_forward.2} parent=27 // pred_check
        %p494 = pneg %p130
      $region34: #{upconv_forward.2} parent=27 // pred_check_branch
        %496 = sbr.rel (%p494) target = $region36
      $region35: #{upconv_forward.2} parent=27 // pred_region
        _
      $region36: #{upconv_forward.2} parent=27 // pred_fallthru
        _
      // Predicated region
      $region37: #{upconv_forward.2} parent=27 // pred_check
        %p497 = pneg %p158
      $region38: #{upconv_forward.2} parent=27 // pred_check_branch
        %499 = sbr.rel (%p497) target = $region40
      $region39: #{upconv_forward.2} parent=27 // pred_region
        _
      $region40: #{upconv_forward.2} parent=27 // pred_fallthru
        _
    $region28: #{upconv_forward.2} parent=5 // pred_fallthru
      _
    %p500 = scmp.le.s32.totalorder 2, %s11
    // Predicated region
    $region41: #{upconv_forward.2} parent=5 // pred_check
      %p501 = pneg %p500
    $region42: #{upconv_forward.2} parent=5 // pred_check_branch
      %503 = sbr.rel (%p501) target = $region44
    $region43: #{upconv_forward.2} parent=5 // pred_region
      %s504 = ssub.s32 %s11, 2
      // Predicated region
      $region45: #{upconv_forward.2} parent=43 // pred_check
        %p505 = pneg %p108
      $region46: #{upconv_forward.2} parent=43 // pred_check_branch
        %507 = sbr.rel (%p505) target = $region48
      $region47: #{upconv_forward.2} parent=43 // pred_region
        %s508 = smul.u32 4, %s23
        %p509 = scmp.lt.s32.totalorder %s22, 3
        %s510 = scalar_select %p509, %s22, 3
        %p511 = scmp.lt.s32.totalorder %s508, 3
        %s512 = scalar_select %p511, %s508, 3
        %s513 = smul.addr %s510, 4
        %s514 = sadd.s32 %s512, %s513
        %s515 = smul.addr %s514, 8
        %s516 = scalar_lea.vmem %s2, %s515
      $region48: #{upconv_forward.2} parent=43 // pred_fallthru
        _
      // Predicated region
      $region49: #{upconv_forward.2} parent=43 // pred_check
        %p517 = pneg %p136
      $region50: #{upconv_forward.2} parent=43 // pred_check_branch
        %519 = sbr.rel (%p517) target = $region52
      $region51: #{upconv_forward.2} parent=43 // pred_region
        %p520 = scmp.lt.s32.totalorder %s22, 3
        %s521 = scalar_select %p520, %s22, 3
        %p522 = scmp.lt.s32.totalorder %s23, 0
        %s523 = scalar_select %p522, %s23, 0
        %s524 = sadd.s32 %s523, %s521
        %s525 = smul.addr %s524, 8
        %s526 = scalar_lea.vmem %s3, %s525
      $region52: #{upconv_forward.2} parent=43 // pred_fallthru
        _
      // Predicated region
      $region53: #{upconv_forward.2} parent=43 // pred_check
        %p527 = pneg %p164
      $region54: #{upconv_forward.2} parent=43 // pred_check_branch
        %529 = sbr.rel (%p527) target = $region56
      $region55: #{upconv_forward.2} parent=43 // pred_region
        %p530 = scmp.lt.s32.totalorder %s22, 3
        %s531 = scalar_select %p530, %s22, 3
        %p532 = scmp.lt.s32.totalorder %s23, 0
        %s533 = scalar_select %p532, %s23, 0
        %s534 = sadd.s32 %s533, %s531
        %s535 = smul.addr %s534, 8
        %s536 = scalar_lea.vmem %s4, %s535
      $region56: #{upconv_forward.2} parent=43 // pred_fallthru
        _
    $region44: #{upconv_forward.2} parent=5 // pred_fallthru
      _
  $region6: #{upconv_forward.2} parent=0 // loop_footer
    %s15 = sadd.s32 1, %s11
  $region7: #{upconv_forward.2} parent=0 // loop_footer_branch
    %10 = sbr.rel target = $region3
  $region8: #{upconv_forward.2} parent=0 // loop_exit
    _

</llo_original>
